<compile_context>
chip_gen: v7x
topology: tpu7x:2x2x1
jax: 0.10.0
libtpu: 0.0.40
codegen_flags: <defaults>
</compile_context>

<pallas_src>
import functools

import jax
import jax.numpy as jnp
from jax.experimental import pallas as pl
from jax.experimental.pallas import tpu as pltpu


# ---------------------------------------------------------------------------
# Kernels
# ---------------------------------------------------------------------------

def _rmsnorm_affine_kernel(x_ref, w_ref, o_ref, *, eps, inv_dim, x_dtype):
    """One (tm, dim_padded) row tile. w_ref is (1, dim_padded), broadcast over rows."""
    xf = x_ref[...].astype(jnp.float32)
    # sum/true_dim == mean over the real feature dim (zero padding adds nothing).
    ms = jnp.sum(xf * xf, axis=-1, keepdims=True) * inv_dim
    normed = (xf * jax.lax.rsqrt(ms + eps)).astype(x_dtype)   # .type_as(x)
    o_ref[...] = (normed * w_ref[...]).astype(o_ref.dtype)    # * weight (promotes)


def _rmsnorm_plain_kernel(x_ref, o_ref, *, eps, inv_dim, x_dtype):
    xf = x_ref[...].astype(jnp.float32)
    ms = jnp.sum(xf * xf, axis=-1, keepdims=True) * inv_dim
    o_ref[...] = (xf * jax.lax.rsqrt(ms + eps)).astype(x_dtype).astype(o_ref.dtype)


# ---------------------------------------------------------------------------
# Wrapper
# ---------------------------------------------------------------------------

def _vmem_capacity_bytes():
    """Physical VMEM of the current chip; conservative fallback = v7x (64 MiB)."""
    try:
        return int(pltpu.get_tpu_info().vmem_capacity_bytes)
    except Exception:
        return 64 * 1024 * 1024


def rms_norm(x, weight=None, *, eps=1e-6, block_rows=None):
    """Pallas RMSNorm over the last dim of `x`.

    Matches the PyTorch module:
        out = (x.float() * rsqrt(mean(x.float()**2, -1) + eps)).type_as(x)
        if weight is not None: out = out * weight
    """
    orig_shape = x.shape
    dim = orig_shape[-1]
    M = 1
    for s in orig_shape[:-1]:
        M *= s

    x2d = x.reshape(M, dim)

    # ---- lane-dense feature dim: pad to a multiple of 128 if needed --------
    LANE = 128
    pad = (-dim) % LANE
    dim_p = dim + pad
    if pad:
        x2d = jnp.pad(x2d, ((0, 0), (0, pad)))

    itemsize_in = jnp.dtype(x.dtype).itemsize
    if weight is not None:
        out_dtype = jnp.result_type(x.dtype, weight.dtype)
    else:
        out_dtype = x.dtype
    itemsize_out = jnp.dtype(out_dtype).itemsize

    # ---- VMEM budget, derived per chip generation --------------------------
    vmem_cap = _vmem_capacity_bytes()
    # Scoped limit: half of physical VMEM (64 MiB on v5e/v6e, 32 MiB on v7x).
    vmem_limit = min(vmem_cap // 2, 96 * 1024 * 1024)
    # Tile budget inside the scoped limit (headroom for Pallas bookkeeping).
    tile_budget = (vmem_limit * 3) // 4

    # Sublane alignment for the row dim of a block (f32: 8, bf16: 16, i8: 32).
    row_align = 8 * max(1, 4 // max(itemsize_in, 1))

    if block_rows is None:
        # Per-row VMEM: 2x double-buffered input + 2x double-buffered output
        # + the f32 intermediate (xf) for the live tile.
        per_row = dim_p * (2 * itemsize_in + 2 * itemsize_out + 4)
        block_rows = max(row_align, tile_budget // max(per_row, 1))
        block_rows = (block_rows // row_align) * row_align

    # v7x megacore: keep >= 2 grid steps whenever M permits so the "parallel"
    # grid axis shards across both TensorCores.
    if M >= 2 * row_align:
        half = -(-M // 2)                                   # ceil(M / 2)
        half = ((half + row_align - 1) // row_align) * row_align
        block_rows = min(block_rows, half)

    if M <= block_rows or M < row_align:
        block_rows = M                                      # full extent -> legal
    block_rows = max(1, min(block_rows, M))

    grid = (pl.cdiv(M, block_rows),)
    inv_dim = 1.0 / float(dim)

    if weight is not None:
        w2d = weight.reshape(1, dim)
        if pad:
            w2d = jnp.pad(w2d, ((0, 0), (0, pad)))
        kernel = functools.partial(_rmsnorm_affine_kernel,
                                   eps=eps, inv_dim=inv_dim, x_dtype=x.dtype)
        in_specs = [
            pl.BlockSpec((block_rows, dim_p), lambda i: (i, 0)),
            pl.BlockSpec((1, dim_p), lambda i: (0, 0)),
        ]
        args = (x2d, w2d)
        w_bytes = w2d.size * jnp.dtype(w2d.dtype).itemsize
    else:
        kernel = functools.partial(_rmsnorm_plain_kernel,
                                   eps=eps, inv_dim=inv_dim, x_dtype=x.dtype)
        in_specs = [pl.BlockSpec((block_rows, dim_p), lambda i: (i, 0))]
        args = (x2d,)
        w_bytes = 0

    cost = pl.CostEstimate(
        flops=4 * M * dim,                 # square, reduce, scale, affine
        transcendentals=M,                 # one rsqrt per row
        bytes_accessed=(M * dim_p * itemsize_in + w_bytes
                        + M * dim_p * itemsize_out),
    )

    out = pl.pallas_call(
        kernel,
        out_shape=jax.ShapeDtypeStruct((M, dim_p), out_dtype),
        grid=grid,
        in_specs=in_specs,
        out_specs=pl.BlockSpec((block_rows, dim_p), lambda i: (i, 0)),
        compiler_params=pltpu.CompilerParams(
            dimension_semantics=("parallel",),
            vmem_limit_bytes=vmem_limit,
        ),
        cost_estimate=cost,
    )(*args)

    if pad:
        out = out[:, :dim]
    return out.reshape(orig_shape)


# ---------------------------------------------------------------------------
# Pure-JAX reference (same math, no Pallas)
# ---------------------------------------------------------------------------

def rms_norm_ref(x, weight=None, eps=1e-6):
    xf = x.astype(jnp.float32)
    out = xf * jax.lax.rsqrt(jnp.mean(xf * xf, axis=-1, keepdims=True) + eps)
    out = out.astype(x.dtype)
    if weight is not None:
        out = out * weight
    return out


# ---------------------------------------------------------------------------
if __name__ == "__main__":
    eps = 1e-6
    key = jax.random.PRNGKey(0)
    kx, kw, kx2, kw2 = jax.random.split(key, 4)

    # --- f32, elementwise_affine=True (B=2, T=8, dim=256) --------------------
    B, T, dim = 2, 8, 256
    x = jax.random.normal(kx, (B, T, dim), jnp.float32)
    weight = 1.0 + 0.1 * jax.random.normal(kw, (dim,), jnp.float32)

    out = jax.block_until_ready(rms_norm(x, weight, eps=eps))
    ref = rms_norm_ref(x, weight, eps=eps)
    err = float(jnp.max(jnp.abs(out - ref)))
    assert err < 1e-5, f"affine f32 mismatch vs reference: {err}"

    # --- f32, elementwise_affine=False ---------------------------------------
    out2 = jax.block_until_ready(rms_norm(x, None, eps=eps))
    ref2 = rms_norm_ref(x, None, eps=eps)
    err2 = float(jnp.max(jnp.abs(out2 - ref2)))
    assert err2 < 1e-5, f"no-affine mismatch vs reference: {err2}"

    # --- bf16 input, f32 weight (norm in f32, cast back, then affine) --------
    xb = x.astype(jnp.bfloat16)
    out3 = jax.block_until_ready(rms_norm(xb, weight, eps=eps))
    ref3 = rms_norm_ref(xb, weight, eps=eps)
    err3 = float(jnp.max(jnp.abs(out3.astype(jnp.float32) - ref3.astype(jnp.float32))))
    assert err3 < 2e-2, f"bf16 mismatch vs reference: {err3}"

    # --- larger M (multi-tile grid path) -------------------------------------
    x4 = jax.random.normal(kx2, (4, 64, dim), jnp.float32)
    out4 = jax.block_until_ready(rms_norm(x4, weight, eps=eps))
    ref4 = rms_norm_ref(x4, weight, eps=eps)
    err4 = float(jnp.max(jnp.abs(out4 - ref4)))
    assert err4 < 1e-5, f"multi-tile mismatch vs reference: {err4}"

    # --- non-128-multiple feature dim (padded lane-dense path) ---------------
    dim5 = 192
    x5 = jax.random.normal(kx2, (2, 8, dim5), jnp.float32)
    w5 = 1.0 + 0.1 * jax.random.normal(kw2, (dim5,), jnp.float32)
    out5 = jax.block_until_ready(rms_norm(x5, w5, eps=eps))
    ref5 = rms_norm_ref(x5, w5, eps=eps)
    err5 = float(jnp.max(jnp.abs(out5 - ref5)))
    assert err5 < 1e-5, f"padded-dim mismatch vs reference: {err5}"

    print("KERNEL_OK")
</pallas_src>

<mosaic_0001>
module attributes {stable_mosaic.version = 11 : i64} {
  func.func @_rmsnorm_affine_kernel(%arg0: i32, %arg1: memref<8x256xf32, #tpu.memory_space<vmem>>, %arg2: memref<1x256xf32, #tpu.memory_space<vmem>>, %arg3: memref<8x256xf32, #tpu.memory_space<vmem>>) attributes {dimension_semantics = [#tpu.dimension_semantics<parallel>], iteration_bounds = array<i64: 2>, scalar_prefetch = 0 : i64, scratch_operands = 0 : i64, tpu.core_type = #tpu.core_type<tc>, window_params = [{transform_indices = @transform_0, window_bounds = array<i64: 8, 256>}, {pipeline_mode = #tpu.pipeline_mode<synchronous>, transform_indices = @transform_1, window_bounds = array<i64: 1, 256>}, {transform_indices = @transform_2, window_bounds = array<i64: 8, 256>}]} {
    %c0 = arith.constant 0 : index
    %c0_0 = arith.constant 0 : index
    %0 = vector.load %arg1[%c0, %c0_0] : memref<8x256xf32, #tpu.memory_space<vmem>>, vector<8x256xf32>
    %1 = arith.mulf %0, %0 : vector<8x256xf32>
    %cst = arith.constant dense<0.000000e+00> : vector<8xf32>
    %2 = vector.multi_reduction <add>, %1, %cst [1] : vector<8x256xf32> to vector<8xf32>
    %3 = vector.shape_cast %2 : vector<8xf32> to vector<8x1xf32>
    %cst_1 = arith.constant 3.906250e-03 : f32
    %4 = vector.broadcast %cst_1 : f32 to vector<8x1xf32>
    %5 = arith.mulf %3, %4 : vector<8x1xf32>
    %cst_2 = arith.constant 9.99999997E-7 : f32
    %6 = vector.broadcast %cst_2 : f32 to vector<8x1xf32>
    %7 = arith.addf %5, %6 : vector<8x1xf32>
    %8 = math.rsqrt %7 : vector<8x1xf32>
    %9 = vector.broadcast %8 : vector<8x1xf32> to vector<8x256xf32>
    %10 = arith.mulf %0, %9 : vector<8x256xf32>
    %c0_3 = arith.constant 0 : index
    %c0_4 = arith.constant 0 : index
    %11 = vector.load %arg2[%c0_3, %c0_4] : memref<1x256xf32, #tpu.memory_space<vmem>>, vector<1x256xf32>
    %12 = vector.broadcast %11 : vector<1x256xf32> to vector<8x256xf32>
    %13 = arith.mulf %10, %12 : vector<8x256xf32>
    %c0_5 = arith.constant 0 : index
    %c0_6 = arith.constant 0 : index
    %14 = vector.load %arg3[%c0_5, %c0_6] : memref<8x256xf32, #tpu.memory_space<vmem>>, vector<8x256xf32>
    tpu.vector_store %arg3[%c0_5, %c0_6], %13 {strides = array<i32>} : memref<8x256xf32, #tpu.memory_space<vmem>>, vector<8x256xf32>,
    return
  }
  func.func @transform_0(%arg0: i32) -> (i32, i32) {
    %c0_i32 = arith.constant 0 : i32
    %c0_i32_0 = arith.constant 0 : i32
    return %arg0, %c0_i32 : i32, i32
  }
  func.func @transform_1(%arg0: i32) -> (i32, i32) {
    %c0_i32 = arith.constant 0 : i32
    %c0_i32_0 = arith.constant 0 : i32
    %c0_i32_1 = arith.constant 0 : i32
    return %c0_i32, %c0_i32_0 : i32, i32
  }
  func.func @transform_2(%arg0: i32) -> (i32, i32) {
    %c0_i32 = arith.constant 0 : i32
    %c0_i32_0 = arith.constant 0 : i32
    return %arg0, %c0_i32 : i32, i32
  }
}

</mosaic_0001>

<llo_original>
// kernel: tpu_custom_call.1
$region0: #{tpu_custom_call.1}
  #allocation0 [shape = 'u32[]', space=smem, size = 0x4, offset = 0x4, fixed_abs, tag = 'smem constant byte address 0x4 - core index']
  #allocation1 [shape = 'u32[144,128]{1,0:T(1,128)}', space=vmem, size = 0x12000, scoped, tag = 'internal scratch']
  %s0 = inlined_call_operand.hbm [shape: f32[16,256], index: 0, kind: input, shape index: {}]
  %s1 = inlined_call_operand.vmem [shape: f32[1,256], index: 1, kind: input, shape index: {}]
  %s2 = inlined_call_operand.hbm [shape: f32[16,256], index: 2, kind: output, shape index: {}]
  %s3 = sld [smem:[#allocation0]]
  $region45: #{tpu_custom_call.1} parent=0
    _
  %s5 = ssub.s32 1, %s3
  %s6 = scalar_select 0, %s5, %s3
  $region1: #{tpu_custom_call.1} parent=0
    #allocation2 [shape = 'u8[16384]{0}', space=vmem, size = 0x4000, scoped, tag = 'input window, operand 0']
    #allocation3 [shape = 's32[2]{0}', space=sflag, size = 0x8, scoped, tag = 'scoped memory for tpu_custom_call.1']
    #allocation4 [shape = 's32[2]{0}', space=sflag, size = 0x8, scoped, tag = 'scoped memory for tpu_custom_call.1']
    #allocation5 [shape = 'u8[16384]{0}', space=vmem, size = 0x4000, scoped, tag = 'output window, operand 0']
    %7 = vsyncpa [#allocation3], 0
    %s8 = scalar_lea.sflag [#allocation3], 1
    %9 = vsyncpa %s8, 0
    %10 = vsyncpa [#allocation4], 0
    %s11 = scalar_lea.sflag [#allocation4], 1
    %12 = vsyncpa %s11, 0
    loop: start=0, step=1, limit=4
    $region2: #{tpu_custom_call.1} parent=1 // loop_pre_header
      _
    $region3: #{tpu_custom_call.1} parent=1 // loop_header
      %s14 = sphi 0, %s18
      %p15 = scmp.ge.s32.totalorder %s14, 4
      %s24 = sphi 0, %s26
      %s27 = sphi 0, %s24
      %s28 = sphi 0, %s27
      %s44 = sphi 0, %s28
      %s48 = sphi 0, %s48
      %s50 = sphi 0, %s48
      %s51 = sphi 0, %s50
      %s65 = sphi 0, %s51
      %s71 = sphi 0, %s73
      %s74 = sphi 0, %s71
      %s75 = sphi 0, %s74
      %s91 = sphi 0, %s75
    $region4: #{tpu_custom_call.1} parent=1 // loop_header_branch
      %17 = sbr.rel (%p15) target = $region8
    $region5: #{tpu_custom_call.1} parent=1 // loop_body
      %s19 = ssub.s32 %s14, 1
      %s20 = ssub.s32 %s14, 2
      %s21 = sadd.s32 %s14, 1
      %s22 = ssub.s32 %s14, %s21
      %p23 = scmp.eq.s32.totalorder %s22, 0
      %s25 = sadd.s32 %s24, 1
      %s26 = scalar_select %p23, %s24, %s25
      %p29 = pneg %p23
      %p30 = scmp.eq.s32.totalorder %s14, 1
      %p31 = por %p29, %p30
      %p32 = scmp.ne.s32.totalorder %s24, %s27
      %p33 = scmp.eq.s32.totalorder %s14, 0
      %p34 = por %p32, %p33
      %p35 = scmp.ne.s32.totalorder %s24, %s27
      %p36 = scmp.eq.s32.totalorder %s19, 1
      %p37 = por %p35, %p36
      %p38 = scmp.ne.s32.totalorder %s27, %s28
      %p39 = scmp.eq.s32.totalorder %s19, 0
      %p40 = por %p38, %p39
      %p41 = scmp.ne.s32.totalorder %s27, %s28
      %p42 = scmp.eq.s32.totalorder %s20, 1
      %p43 = por %p41, %p42
      %p45 = scmp.ne.s32.totalorder %s28, %s44
      %p46 = scmp.eq.s32.totalorder %s20, 0
      %p47 = por %p45, %p46
      %s49 = sadd.s32 %s48, 1
      %p52 = scmp.eq.s32.totalorder %s14, 1
      %p53 = scmp.ne.s32.totalorder %s48, %s50
      %p54 = scmp.eq.s32.totalorder %s14, 0
      %p55 = por %p53, %p54
      %p56 = scmp.ne.s32.totalorder %s48, %s50
      %p57 = scmp.eq.s32.totalorder %s19, 1
      %p58 = por %p56, %p57
      %p59 = scmp.ne.s32.totalorder %s50, %s51
      %p60 = scmp.eq.s32.totalorder %s19, 0
      %p61 = por %p59, %p60
      %p62 = scmp.ne.s32.totalorder %s50, %s51
      %p63 = scmp.eq.s32.totalorder %s20, 1
      %p64 = por %p62, %p63
      %p66 = scmp.ne.s32.totalorder %s51, %s65
      %p67 = scmp.eq.s32.totalorder %s20, 0
      %p68 = por %p66, %p67
      %s69 = ssub.s32 %s14, %s21
      %p70 = scmp.eq.s32.totalorder %s69, 0
      %s72 = sadd.s32 %s71, 1
      %s73 = scalar_select %p70, %s71, %s72
      %p76 = pneg %p70
      %p77 = scmp.eq.s32.totalorder %s14, 1
      %p78 = por %p76, %p77
      %p79 = scmp.ne.s32.totalorder %s71, %s74
      %p80 = scmp.eq.s32.totalorder %s14, 0
      %p81 = por %p79, %p80
      %p82 = scmp.ne.s32.totalorder %s71, %s74
      %p83 = scmp.eq.s32.totalorder %s19, 1
      %p84 = por %p82, %p83
      %p85 = scmp.ne.s32.totalorder %s74, %s75
      %p86 = scmp.eq.s32.totalorder %s19, 0
      %p87 = por %p85, %p86
      %p88 = scmp.ne.s32.totalorder %s74, %s75
      %p89 = scmp.eq.s32.totalorder %s20, 1
      %p90 = por %p88, %p89
      %p92 = scmp.ne.s32.totalorder %s75, %s91
      %p93 = scmp.eq.s32.totalorder %s20, 0
      %p94 = por %p92, %p93
      %p95 = scmp.le.s32.totalorder 1, %s14
      %p96 = scmp.lt.s32.totalorder %s14, 3
      %p97 = pnand %p95, %p96
      %p98 = pneg %p97
      // Predicated region
      $region9: #{tpu_custom_call.1} parent=5 // pred_check
        _
      $region10: #{tpu_custom_call.1} parent=5 // pred_check_branch
        %100 = sbr.rel (%p97) target = $region12
      $region11: #{tpu_custom_call.1} parent=5 // pred_region
        %s101 = ssub.s32 %s14, 1
        // Predicated region
        $region13: #{tpu_custom_call.1} parent=11 // pred_check
          %p102 = pneg %p61
        $region14: #{tpu_custom_call.1} parent=11 // pred_check_branch
          %104 = sbr.rel (%p102) target = $region16
        $region15: #{tpu_custom_call.1} parent=11 // pred_region
          _
        $region16: #{tpu_custom_call.1} parent=11 // pred_fallthru
          _
      $region12: #{tpu_custom_call.1} parent=5 // pred_fallthru
        _
      %p105 = scmp.lt.s32.totalorder %s14, 2
      // Predicated region
      $region17: #{tpu_custom_call.1} parent=5 // pred_check
        %p106 = pneg %p105
      $region18: #{tpu_custom_call.1} parent=5 // pred_check_branch
        %108 = sbr.rel (%p106) target = $region20
      $region19: #{tpu_custom_call.1} parent=5 // pred_region
        // Predicated region
        $region21: #{tpu_custom_call.1} parent=19 // pred_check
          %p109 = pneg %p34
        $region22: #{tpu_custom_call.1} parent=19 // pred_check_branch
          %111 = sbr.rel (%p109) target = $region24
        $region23: #{tpu_custom_call.1} parent=19 // pred_region
          %s112 = sand.u32 %s24, 1
          %s113 = scalar_lea.sflag [#allocation3], %s112
          %s114 = sand.u32 %s24, 1
          %s115 = smul.addr %s114, 16
          %s116 = scalar_lea.vmem [#allocation2], %s115
          %s118 = ssub.s32 256, 256
          %119 = vsyncadd %s113, %s118
          %s120 = smul.addr %s14, 2
          %s121 = smul.addr %s120, 128
          %s122 = scalar_lea.hbm %s0, %s121
          %s124 = sshll.u32 %s116, 4
          %s125 = int_to_ptr.vmem [resolvable:$true] %s124
          %127 = dma.hbm_to_vmem [thread:$0]  %s122, 256, %s125, %s113
        $region24: #{tpu_custom_call.1} parent=19 // pred_fallthru
          _
      $region20: #{tpu_custom_call.1} parent=5 // pred_fallthru
        _
      %p128 = scmp.le.s32.totalorder 1, %s14
      %p129 = scmp.lt.s32.totalorder %s14, 3
      %p130 = pnand %p128, %p129
      %p131 = pneg %p130
      // Predicated region
      $region25: #{tpu_custom_call.1} parent=5 // pred_check
        _
      $region26: #{tpu_custom_call.1} parent=5 // pred_check_branch
        %133 = sbr.rel (%p130) target = $region28
      $region27: #{tpu_custom_call.1} parent=5 // pred_region
        %s134 = ssub.s32 %s14, 1
        %s135 = sand.u32 %s27, 1
        %s136 = scalar_lea.sflag [#allocation3], %s135
        %s137 = sand.u32 %s27, 1
        %s138 = smul.addr %s137, 16
        %s139 = scalar_lea.vmem [#allocation2], %s138
        // Predicated region
        $region29: #{tpu_custom_call.1} parent=27 // pred_check
          %p140 = pneg %p40
        $region30: #{tpu_custom_call.1} parent=27 // pred_check_branch
          %142 = sbr.rel (%p140) target = $region32
        $region31: #{tpu_custom_call.1} parent=27 // pred_region
          %143 = dma.done %s136, 256
        $region32: #{tpu_custom_call.1} parent=27 // pred_fallthru
          _
        %s144 = sand.u32 %s27, 1
        %s145 = scalar_lea.sflag [#allocation3], %s144
        %s146 = sand.u32 %s27, 1
        %s147 = smul.addr %s146, 16
        %s148 = scalar_lea.vmem [#allocation2], %s147
        %p149 = pneg %p40
        %p150 = pneg %p37
        %p151 = pneg %p61
        %p152 = pneg %p58
        %p153 = pneg %p87
        %p154 = pneg %p84
        %s155 = sand.u32 %s74, 1
        %s156 = scalar_lea.sflag [#allocation4], %s155
        %s157 = sand.u32 %s74, 1
        %s158 = smul.addr %s157, 16
        %s159 = scalar_lea.vmem [#allocation5], %s158
        %v160 = vld [vmem:[%s139] sm:$0xff]
        %v161 = vld [vmem:[%s139 + $0x8] sm:$0xff]
        %v162 = vmul.f32 %v160, %v160
        %v163 = vmul.f32 %v161, %v161
        %v164 = vadd.f32 %v162, %v163
        %165 = vadd.xlane.f32.xlu0 %v164
        %v166 = vpop.xlane.xlu0 %165
        %v167 = vmul.f32 %v166, 0.00390625
        %v168 = vadd.f32 %v167, 1e-06
        %v169 = vrsqrt.pop %v168
        %v170 = vmul.f32 %v160, %v169
        %v171 = vmul.f32 %v161, %v169
        %v172 = vld [vmem:[%s1] sm:$0x3]
        %v174 = vlaneseq
        %v175 = vshrl.u32 %v174, 7
        %v176 = vsub.s32 0, %v175
        %v177 = vrot.slane %v172, %v176
        %v178 = vlaneseq
        %v179 = vshrl.u32 %v178, 7
        %v180 = vsub.s32 1, %v179
        %v181 = vrot.slane %v172, %v180
        %v184 = vmul.f32 %v170, %v177
        %v185 = vmul.f32 %v171, %v181
        %186 = vst [vmem:[%s159] sm:$0xff] %v184
        %187 = vst [vmem:[%s159 + $0x8] sm:$0xff] %v185
        %s188 = sand.u32 %s74, 1
        %s189 = scalar_lea.sflag [#allocation4], %s188
        %s190 = sand.u32 %s74, 1
        %s191 = smul.addr %s190, 16
        %s192 = scalar_lea.vmem [#allocation5], %s191
        // Predicated region
        $region33: #{tpu_custom_call.1} parent=27 // pred_check
          %p193 = pneg %p84
        $region34: #{tpu_custom_call.1} parent=27 // pred_check_branch
          %195 = sbr.rel (%p193) target = $region36
        $region35: #{tpu_custom_call.1} parent=27 // pred_region
          %s197 = ssub.s32 256, 256
          %198 = vsyncadd %s189, %s197
          %s199 = smul.addr %s19, 2
          %s200 = smul.addr %s199, 128
          %s201 = scalar_lea.hbm %s2, %s200
          %s203 = sshll.u32 %s192, 4
          %s204 = int_to_ptr.vmem [resolvable:$true] %s203
          %206 = dma.vmem_to_hbm [thread:$0]  %s204, 256, %s201, %s189
        $region36: #{tpu_custom_call.1} parent=27 // pred_fallthru
          _
      $region28: #{tpu_custom_call.1} parent=5 // pred_fallthru
        _
      %p207 = scmp.le.s32.totalorder 2, %s14
      // Predicated region
      $region37: #{tpu_custom_call.1} parent=5 // pred_check
        %p208 = pneg %p207
      $region38: #{tpu_custom_call.1} parent=5 // pred_check_branch
        %210 = sbr.rel (%p208) target = $region40
      $region39: #{tpu_custom_call.1} parent=5 // pred_region
        %s211 = ssub.s32 %s14, 2
        // Predicated region
        $region41: #{tpu_custom_call.1} parent=39 // pred_check
          %p212 = pneg %p90
        $region42: #{tpu_custom_call.1} parent=39 // pred_check_branch
          %214 = sbr.rel (%p212) target = $region44
        $region43: #{tpu_custom_call.1} parent=39 // pred_region
          %s215 = sand.u32 %s75, 1
          %s216 = scalar_lea.sflag [#allocation4], %s215
          %s217 = sand.u32 %s75, 1
          %s218 = smul.addr %s217, 16
          %s219 = scalar_lea.vmem [#allocation5], %s218
          %220 = dma.done %s216, 256
        $region44: #{tpu_custom_call.1} parent=39 // pred_fallthru
          _
      $region40: #{tpu_custom_call.1} parent=5 // pred_fallthru
        _
    $region6: #{tpu_custom_call.1} parent=1 // loop_footer
      %s18 = sadd.s32 1, %s14
    $region7: #{tpu_custom_call.1} parent=1 // loop_footer_branch
      %13 = sbr.rel target = $region3
    $region8: #{tpu_custom_call.1} parent=1 // loop_exit
      _
    %221 = vsyncpa [#allocation3], 1
    %s222 = scalar_lea.sflag [#allocation3], 1
    %223 = vsyncpa %s222, 1
    %224 = vsyncpa [#allocation4], 1
    %s225 = scalar_lea.sflag [#allocation4], 1
    %226 = vsyncpa %s225, 1

</llo_original>
